<compile_context>
chip_gen: v7x
topology: tpu7x:2x2x1
jax: 0.10.0
libtpu: 0.0.40
codegen_flags: <defaults>
</compile_context>

<pallas_src>
import math
import functools

import jax
import jax.numpy as jnp
from jax.experimental import pallas as pl
from jax.experimental.pallas import tpu as pltpu

_LOG2 = math.log(2.0)
_VMEM_LIMIT_BYTES = 48 << 20          # < 64 MiB physical VMEM on v7x


# ----------------------------------------------------------------------------
# helpers
# ----------------------------------------------------------------------------
def _softplus(x):
    # numerically stable log(1 + exp(x))  (matches F.softplus)
    return jnp.maximum(x, 0.0) + jnp.log(1.0 + jnp.exp(-jnp.abs(x)))


def _sublane_multiple(dtype):
    bits = jnp.dtype(dtype).itemsize * 8
    if bits >= 32:
        return 8
    if bits == 16:
        return 16
    return 32


def _choose_tile_n(n, d, dtype, budget_bytes=16 << 20):
    """Largest node tile: 2 pipeline buffers (input dtype) + f32 temporaries."""
    itemsize = jnp.dtype(dtype).itemsize
    sub = _sublane_multiple(dtype)
    per_row = d * (2 * itemsize + 12)
    t = max(sub, budget_bytes // max(per_row, 1))
    t = min(t, 8192)
    if t >= n:
        return n                       # single full-extent tile, no masking cost
    return max(sub, (t // sub) * sub)


# ----------------------------------------------------------------------------
# Resident fast path: one HBM pass, everything computed from VMEM-resident data
# ----------------------------------------------------------------------------
def _gcl_resident_kernel(z1_ref, z2_ref, out_ref):
    z1 = z1_ref[...].astype(jnp.float32)                  # (n1, D)
    z2 = z2_ref[...].astype(jnp.float32)                  # (n2, D)
    g1 = jnp.sum(z1, axis=0, keepdims=True)               # (1, D)
    g2 = jnp.sum(z2, axis=0, keepdims=True)               # (1, D)

    # self dot in column 0, cross dot in column 1 -> one softplus per view.
    d1 = jnp.concatenate(
        [jnp.sum(z1 * g1, axis=1, keepdims=True),
         jnp.sum(z1 * g2, axis=1, keepdims=True)], axis=1)     # (n1, 2)
    d2 = jnp.concatenate(
        [jnp.sum(z2 * g2, axis=1, keepdims=True),
         jnp.sum(z2 * g1, axis=1, keepdims=True)], axis=1)     # (n2, 2)

    sp1 = _softplus(-d1)
    sp2 = _softplus(-d2)
    # E(a) - E(b) = sp(-b) - sp(-a): the log(2) terms cancel within each view.
    l1 = jnp.sum(sp1[:, 1:2] - sp1[:, 0:1], keepdims=True)     # (1, 1)
    l2 = jnp.sum(sp2[:, 1:2] - sp2[:, 0:1], keepdims=True)     # (1, 1)
    out_ref[...] = (l1 - l2).astype(out_ref.dtype)


# ----------------------------------------------------------------------------
# Streamed path: per-view kernel, 1-D grid over node tiles, scalar accumulator
# ----------------------------------------------------------------------------
def _gcl_stream_kernel(g_ref, z_ref, out_ref, *, n_valid, tile_n):
    i = pl.program_id(0)

    @pl.when(i == 0)
    def _init():
        out_ref[...] = jnp.zeros_like(out_ref)

    z = z_ref[...].astype(jnp.float32)                     # (tile_n, D)
    g_self = g_ref[0:1, :]                                 # (1, D) f32
    g_other = g_ref[1:2, :]                                # (1, D) f32

    dots = jnp.concatenate(
        [jnp.sum(z * g_self, axis=1, keepdims=True),
         jnp.sum(z * g_other, axis=1, keepdims=True)], axis=1)  # (tile_n, 2)
    sp = _softplus(-dots)                                  # single EUP pass
    contrib = sp[:, 1:2] - sp[:, 0:1]                      # (tile_n, 1)

    # Mask the ragged last tile (reads past the array end are garbage).
    row = i * tile_n + jax.lax.broadcasted_iota(jnp.int32, (tile_n, 1), 0)
    contrib = jnp.where(row < n_valid, contrib, 0.0)

    out_ref[...] += jnp.sum(contrib, keepdims=True)        # scalar accumulate


def _stream_partial(z, g_pair, *, tile_n):
    """sum_i [ softplus(-z_i.g_other) - softplus(-z_i.g_self) ] for one view."""
    n, d = z.shape
    num_tiles = pl.cdiv(n, tile_n)
    itemsize = jnp.dtype(z.dtype).itemsize

    kernel = functools.partial(_gcl_stream_kernel, n_valid=n, tile_n=tile_n)
    cost = pl.CostEstimate(
        flops=4 * n * d,
        transcendentals=4 * n,
        bytes_accessed=n * d * itemsize + 2 * d * 4 + 4,
    )
    grid_spec = pltpu.PrefetchScalarGridSpec(
        num_scalar_prefetch=0,
        grid=(num_tiles,),
        in_specs=[
            pl.BlockSpec((2, d), lambda i: (0, 0)),          # g pair, resident
            pl.BlockSpec((tile_n, d), lambda i: (i, 0)),     # node tiles
        ],
        out_specs=pl.BlockSpec((1, 1), lambda i: (0, 0)),    # scalar accumulator
    )
    out = pl.pallas_call(
        kernel,
        out_shape=jax.ShapeDtypeStruct((1, 1), jnp.float32),
        grid_spec=grid_spec,
        compiler_params=pltpu.CompilerParams(
            # Output block accumulates across node tiles -> must be "arbitrary".
            # TODO(synk): per-core partial outputs would allow "parallel" (v7x).
            dimension_semantics=("arbitrary",),
            vmem_limit_bytes=_VMEM_LIMIT_BYTES,
        ),
        cost_estimate=cost,
    )(g_pair, z)
    return out[0, 0]


# ----------------------------------------------------------------------------
# Wrapper
# ----------------------------------------------------------------------------
def gcl_forward(z1, z2, *, tile_n=None, resident_bytes_limit=6 << 20,
                force_streamed=False):
    """GCL.forward(z1, z2) -> scalar."""
    n1, d = z1.shape
    n2, d2 = z2.shape
    assert d == d2, "embedding dims must match"

    f32_bytes = 4 * d * (n1 + n2)
    if (not force_streamed) and f32_bytes <= resident_bytes_limit:
        # ---- resident fast path: one HBM pass, no padding, no masking ----
        itemsize = jnp.dtype(z1.dtype).itemsize
        cost = pl.CostEstimate(
            flops=10 * d * (n1 + n2),
            transcendentals=4 * (n1 + n2),
            bytes_accessed=(n1 + n2) * d * itemsize + 4,
        )
        out = pl.pallas_call(
            _gcl_resident_kernel,
            out_shape=jax.ShapeDtypeStruct((1, 1), jnp.float32),
            compiler_params=pltpu.CompilerParams(
                vmem_limit_bytes=_VMEM_LIMIT_BYTES),
            cost_estimate=cost,
        )(z1, z2)
        return out[0, 0]

    # ---- streamed path: graph sums via plain XLA reduces (fuse upstream),
    #      loss via one bandwidth-bound Pallas pass per view ----
    g1 = jnp.sum(z1.astype(jnp.float32), axis=0, keepdims=True)   # (1, D)
    g2 = jnp.sum(z2.astype(jnp.float32), axis=0, keepdims=True)   # (1, D)
    g_12 = jnp.concatenate([g1, g2], axis=0)   # for z1: row0=self, row1=cross
    g_21 = jnp.concatenate([g2, g1], axis=0)   # for z2

    def run(z, g_pair):
        n = z.shape[0]
        sub = _sublane_multiple(z.dtype)
        t = tile_n if tile_n is not None else _choose_tile_n(n, d, z.dtype)
        if t >= n:
            t = n                              # full-extent single tile
        else:
            t = max(sub, (t // sub) * sub)     # dtype-aware sublane rounding
        return _stream_partial(z, g_pair, tile_n=t)

    l1 = run(z1, g_12)
    l2 = run(z2, g_21)
    return l1 - l2


# ----------------------------------------------------------------------------
# Pure-JAX reference (mirrors the PyTorch forward exactly)
# ----------------------------------------------------------------------------
def gcl_reference(z1, z2):
    z1 = z1.astype(jnp.float32)
    z2 = z2.astype(jnp.float32)
    g1 = jnp.sum(z1, axis=0, keepdims=True)
    g2 = jnp.sum(z2, axis=0, keepdims=True)

    def E(x):
        return _LOG2 - jax.nn.softplus(-x)

    L1 = E(z1 @ g1.T).sum() - E(z1 @ g2.T).sum()
    L2 = E(z2 @ g2.T).sum() - E(z2 @ g1.T).sum()
    return L1 - L2


if __name__ == "__main__":
    key = jax.random.PRNGKey(0)
    k1, k2, k3, k4 = jax.random.split(key, 4)

    # Case A: small, resident fast path (node embeddings of two graph views).
    n_nodes, emb_dim = 24, 32
    z1 = 0.1 * jax.random.normal(k1, (n_nodes, emb_dim), jnp.float32)
    z2 = 0.1 * jax.random.normal(k2, (n_nodes, emb_dim), jnp.float32)
    out_a = jax.block_until_ready(gcl_forward(z1, z2))
    ref_a = gcl_reference(z1, z2)
    assert jnp.allclose(out_a, ref_a, atol=2e-4, rtol=2e-4), (out_a, ref_a)

    # Case B: unequal node counts, still resident (no padding needed).
    z1b = 0.1 * jax.random.normal(k3, (40, emb_dim), jnp.float32)
    z2b = 0.1 * jax.random.normal(k4, (29, emb_dim), jnp.float32)
    out_b = jax.block_until_ready(gcl_forward(z1b, z2b))
    ref_b = gcl_reference(z1b, z2b)
    assert jnp.allclose(out_b, ref_b, atol=2e-4, rtol=2e-4), (out_b, ref_b)

    # Case C: force the streamed path with a tiny tile to exercise the grid,
    # the ragged-last-tile mask and the scalar accumulation.
    out_c = jax.block_until_ready(
        gcl_forward(z1b, z2b, tile_n=8, force_streamed=True))
    assert jnp.allclose(out_c, ref_b, atol=2e-4, rtol=2e-4), (out_c, ref_b)

    print("KERNEL_OK")
</pallas_src>

<mosaic_0001>
module attributes {stable_mosaic.version = 11 : i64} {
  func.func @_gcl_resident_kernel(%arg0: memref<24x32xf32, #tpu.memory_space<vmem>>, %arg1: memref<24x32xf32, #tpu.memory_space<vmem>>, %arg2: memref<1x1xf32, #tpu.memory_space<vmem>>) attributes {dimension_semantics = [], scalar_prefetch = 0 : i64, scratch_operands = 0 : i64, tpu.core_type = #tpu.core_type<tc>} {
    %c0 = arith.constant 0 : index
    %c0_0 = arith.constant 0 : index
    %0 = vector.load %arg0[%c0, %c0_0] : memref<24x32xf32, #tpu.memory_space<vmem>>, vector<24x32xf32>
    %c0_1 = arith.constant 0 : index
    %c0_2 = arith.constant 0 : index
    %1 = vector.load %arg1[%c0_1, %c0_2] : memref<24x32xf32, #tpu.memory_space<vmem>>, vector<24x32xf32>
    %cst = arith.constant dense<0.000000e+00> : vector<32xf32>
    %2 = vector.multi_reduction <add>, %0, %cst [0] : vector<24x32xf32> to vector<32xf32>
    %3 = vector.shape_cast %2 : vector<32xf32> to vector<1x32xf32>
    %cst_3 = arith.constant dense<0.000000e+00> : vector<32xf32>
    %4 = vector.multi_reduction <add>, %1, %cst_3 [0] : vector<24x32xf32> to vector<32xf32>
    %5 = vector.shape_cast %4 : vector<32xf32> to vector<1x32xf32>
    %6 = vector.broadcast %3 : vector<1x32xf32> to vector<24x32xf32>
    %7 = arith.mulf %0, %6 : vector<24x32xf32>
    %cst_4 = arith.constant dense<0.000000e+00> : vector<24xf32>
    %8 = vector.multi_reduction <add>, %7, %cst_4 [1] : vector<24x32xf32> to vector<24xf32>
    %9 = vector.shape_cast %8 : vector<24xf32> to vector<24x1xf32>
    %10 = vector.broadcast %5 : vector<1x32xf32> to vector<24x32xf32>
    %11 = arith.mulf %0, %10 : vector<24x32xf32>
    %cst_5 = arith.constant dense<0.000000e+00> : vector<24xf32>
    %12 = vector.multi_reduction <add>, %11, %cst_5 [1] : vector<24x32xf32> to vector<24xf32>
    %13 = vector.shape_cast %12 : vector<24xf32> to vector<24x1xf32>
    %14 = tpu.concatenate %9, %13 in 1 : vector<24x1xf32>, vector<24x1xf32> -> vector<24x2xf32>
    %15 = vector.broadcast %5 : vector<1x32xf32> to vector<24x32xf32>
    %16 = arith.mulf %1, %15 : vector<24x32xf32>
    %cst_6 = arith.constant dense<0.000000e+00> : vector<24xf32>
    %17 = vector.multi_reduction <add>, %16, %cst_6 [1] : vector<24x32xf32> to vector<24xf32>
    %18 = vector.shape_cast %17 : vector<24xf32> to vector<24x1xf32>
    %19 = vector.broadcast %3 : vector<1x32xf32> to vector<24x32xf32>
    %20 = arith.mulf %1, %19 : vector<24x32xf32>
    %cst_7 = arith.constant dense<0.000000e+00> : vector<24xf32>
    %21 = vector.multi_reduction <add>, %20, %cst_7 [1] : vector<24x32xf32> to vector<24xf32>
    %22 = vector.shape_cast %21 : vector<24xf32> to vector<24x1xf32>
    %23 = tpu.concatenate %18, %22 in 1 : vector<24x1xf32>, vector<24x1xf32> -> vector<24x2xf32>
    %cst_8 = arith.constant 0.000000e+00 : f32
    %24 = vector.broadcast %cst_8 : f32 to vector<24x2xf32>
    %25 = arith.subf %24, %14 : vector<24x2xf32>
    %cst_9 = arith.constant 0.000000e+00 : f32
    %26 = vector.broadcast %cst_9 : f32 to vector<24x2xf32>
    %27 = arith.maximumf %25, %26 : vector<24x2xf32>
    %28 = math.absf %25 : vector<24x2xf32>
    %cst_10 = arith.constant 0.000000e+00 : f32
    %29 = vector.broadcast %cst_10 : f32 to vector<24x2xf32>
    %30 = arith.subf %29, %28 : vector<24x2xf32>
    %31 = math.exp %30 : vector<24x2xf32>
    %cst_11 = arith.constant 1.000000e+00 : f32
    %32 = vector.broadcast %cst_11 : f32 to vector<24x2xf32>
    %33 = arith.addf %32, %31 : vector<24x2xf32>
    %34 = math.log %33 : vector<24x2xf32>
    %35 = arith.addf %27, %34 : vector<24x2xf32>
    %cst_12 = arith.constant 0.000000e+00 : f32
    %36 = vector.broadcast %cst_12 : f32 to vector<24x2xf32>
    %37 = arith.subf %36, %23 : vector<24x2xf32>
    %cst_13 = arith.constant 0.000000e+00 : f32
    %38 = vector.broadcast %cst_13 : f32 to vector<24x2xf32>
    %39 = arith.maximumf %37, %38 : vector<24x2xf32>
    %40 = math.absf %37 : vector<24x2xf32>
    %cst_14 = arith.constant 0.000000e+00 : f32
    %41 = vector.broadcast %cst_14 : f32 to vector<24x2xf32>
    %42 = arith.subf %41, %40 : vector<24x2xf32>
    %43 = math.exp %42 : vector<24x2xf32>
    %cst_15 = arith.constant 1.000000e+00 : f32
    %44 = vector.broadcast %cst_15 : f32 to vector<24x2xf32>
    %45 = arith.addf %44, %43 : vector<24x2xf32>
    %46 = math.log %45 : vector<24x2xf32>
    %47 = arith.addf %39, %46 : vector<24x2xf32>
    %48 = vector.extract_strided_slice %35 {offsets = [0, 1], sizes = [24, 1], strides = [1, 1]} : vector<24x2xf32> to vector<24x1xf32>
    %49 = vector.extract_strided_slice %35 {offsets = [0, 0], sizes = [24, 1], strides = [1, 1]} : vector<24x2xf32> to vector<24x1xf32>
    %50 = arith.subf %48, %49 : vector<24x1xf32>
    %51 = vector.shape_cast %50 : vector<24x1xf32> to vector<1x24x1xf32>
    %cst_16 = arith.constant dense<0.000000e+00> : vector<1xf32>
    %52 = vector.multi_reduction <add>, %51, %cst_16 [1, 2] : vector<1x24x1xf32> to vector<1xf32>
    %53 = vector.shape_cast %52 : vector<1xf32> to vector<1x1x1xf32>
    %54 = vector.extract %53[0, 0, 0] : f32 from vector<1x1x1xf32>
    %55 = vector.broadcast %54 : f32 to vector<1x1xf32>
    %56 = vector.extract_strided_slice %47 {offsets = [0, 1], sizes = [24, 1], strides = [1, 1]} : vector<24x2xf32> to vector<24x1xf32>
    %57 = vector.extract_strided_slice %47 {offsets = [0, 0], sizes = [24, 1], strides = [1, 1]} : vector<24x2xf32> to vector<24x1xf32>
    %58 = arith.subf %56, %57 : vector<24x1xf32>
    %59 = vector.shape_cast %58 : vector<24x1xf32> to vector<1x24x1xf32>
    %cst_17 = arith.constant dense<0.000000e+00> : vector<1xf32>
    %60 = vector.multi_reduction <add>, %59, %cst_17 [1, 2] : vector<1x24x1xf32> to vector<1xf32>
    %61 = vector.shape_cast %60 : vector<1xf32> to vector<1x1x1xf32>
    %62 = vector.extract %61[0, 0, 0] : f32 from vector<1x1x1xf32>
    %63 = vector.broadcast %62 : f32 to vector<1x1xf32>
    %64 = arith.subf %55, %63 : vector<1x1xf32>
    %c0_18 = arith.constant 0 : index
    %c0_19 = arith.constant 0 : index
    %65 = vector.load %arg2[%c0_18, %c0_19] : memref<1x1xf32, #tpu.memory_space<vmem>>, vector<1x1xf32>
    tpu.vector_store %arg2[%c0_18, %c0_19], %64 {strides = array<i32>} : memref<1x1xf32, #tpu.memory_space<vmem>>, vector<1x1xf32>,
    return
  }
}

</mosaic_0001>

<llo_original>
// kernel: tpu_custom_call.1
$region0: #{tpu_custom_call.1}
  #allocation0 [shape = 'u32[]', space=smem, size = 0x4, offset = 0x4, fixed_abs, tag = 'smem constant byte address 0x4 - core index']
  #allocation1 [shape = 'u32[144,128]{1,0:T(1,128)}', space=vmem, size = 0x12000, scoped, tag = 'internal scratch']
  %s0 = inlined_call_operand.hbm [shape: f32[24,32], index: 0, kind: input, shape index: {}]
  %s1 = inlined_call_operand.hbm [shape: f32[24,32], index: 1, kind: input, shape index: {}]
  %s2 = inlined_call_operand.hbm [shape: f32[1,1], index: 2, kind: output, shape index: {}]
  %s3 = sld [smem:[#allocation0]]
  $region26: #{tpu_custom_call.1} parent=0
    _
  %s5 = ssub.s32 1, %s3
  %s6 = scalar_select 0, %s5, %s3
  $region1: #{tpu_custom_call.1} parent=0
    #allocation2 [shape = 'u8[12288]{0}', space=vmem, size = 0x3000, scoped, tag = 'input window, operand 0, single buffered']
    #allocation3 [shape = 's32[1]{0}', space=sflag, size = 0x4, scoped, tag = 'scoped memory for tpu_custom_call.1']
    #allocation4 [shape = 's32[1]{0}', space=sflag, size = 0x4, scoped, tag = 'scoped memory for tpu_custom_call.1']
    #allocation5 [shape = 'u8[12288]{0}', space=vmem, size = 0x3000, scoped, tag = 'input window, operand 1, single buffered']
    #allocation6 [shape = 's32[1]{0}', space=sflag, size = 0x4, scoped, tag = 'scoped memory for tpu_custom_call.1']
    #allocation7 [shape = 'u8[512]{0}', space=vmem, size = 0x400, scoped, tag = 'output window, operand 0, single buffered']
    %7 = vsyncpa [#allocation3], 0
    %8 = vsyncpa [#allocation6], 0
    %9 = vsyncpa [#allocation4], 0
    // Predicated region
    $region2: #{tpu_custom_call.1} parent=1 // pred_check
      _
    $region3: #{tpu_custom_call.1} parent=1 // pred_check_branch
      %11 = sbr.rel (0) target = $region5
    $region4: #{tpu_custom_call.1} parent=1 // pred_region
      %s13 = ssub.s32 384, 384
      %14 = vsyncadd [#allocation3], %s13
      %s15 = sshll.u32 [#allocation2], 4
      %s16 = int_to_ptr.vmem [resolvable:$true] %s15
      %21 = dma.hbm_to_vmem [thread:$0]  %s0, 384, %s16, [#allocation3], 128, 128, 8
    $region5: #{tpu_custom_call.1} parent=1 // pred_fallthru
      _
    // Predicated region
    $region6: #{tpu_custom_call.1} parent=1 // pred_check
      _
    $region7: #{tpu_custom_call.1} parent=1 // pred_check_branch
      %23 = sbr.rel (0) target = $region9
    $region8: #{tpu_custom_call.1} parent=1 // pred_region
      %s25 = ssub.s32 384, 384
      %26 = vsyncadd [#allocation6], %s25
      %s27 = sshll.u32 [#allocation5], 4
      %s28 = int_to_ptr.vmem [resolvable:$true] %s27
      %33 = dma.hbm_to_vmem [thread:$0]  %s1, 384, %s28, [#allocation6], 128, 128, 8
    $region9: #{tpu_custom_call.1} parent=1 // pred_fallthru
      _
    // Predicated region
    $region10: #{tpu_custom_call.1} parent=1 // pred_check
      _
    $region11: #{tpu_custom_call.1} parent=1 // pred_check_branch
      %35 = sbr.rel (0) target = $region13
    $region12: #{tpu_custom_call.1} parent=1 // pred_region
      %36 = dma.done [#allocation3], 384
    $region13: #{tpu_custom_call.1} parent=1 // pred_fallthru
      _
    // Predicated region
    $region14: #{tpu_custom_call.1} parent=1 // pred_check
      _
    $region15: #{tpu_custom_call.1} parent=1 // pred_check_branch
      %38 = sbr.rel (0) target = $region17
    $region16: #{tpu_custom_call.1} parent=1 // pred_region
      %39 = dma.done [#allocation6], 384
    $region17: #{tpu_custom_call.1} parent=1 // pred_fallthru
      _
    %v40 = vld [vmem:[#allocation2] sm:$0xff]
    %v41 = vld [vmem:[#allocation2 + $0x8] sm:$0xff]
    %v42 = vld [vmem:[#allocation2 + $0x10] sm:$0xff]
    %v43 = vld [vmem:[#allocation5] sm:$0xff]
    %v44 = vld [vmem:[#allocation5 + $0x8] sm:$0xff]
    %v45 = vld [vmem:[#allocation5 + $0x10] sm:$0xff]
    %vm46 = vcmask 261120
    %v47 = vsel %vm46, %v40, 0.0
    %v48 = vsel %vm46, %v41, 0.0
    %v49 = vadd.f32 %v47, %v48
    %v50 = vsel %vm46, %v42, 0.0
    %v51 = vadd.f32 %v49, %v50
    %v52 = vrot.slane %v51, 4
    %v53 = vadd.f32 %v51, %v52
    %v54 = vrot.slane %v53, 2
    %v55 = vadd.f32 %v53, %v54
    %v56 = vrot.slane %v55, 1
    %v57 = vadd.f32 %v55, %v56
    %v58 = vsel %vm46, %v43, 0.0
    %v59 = vsel %vm46, %v44, 0.0
    %v60 = vadd.f32 %v58, %v59
    %v61 = vsel %vm46, %v45, 0.0
    %v62 = vadd.f32 %v60, %v61
    %v63 = vrot.slane %v62, 4
    %v64 = vadd.f32 %v62, %v63
    %v65 = vrot.slane %v64, 2
    %v66 = vadd.f32 %v64, %v65
    %v67 = vrot.slane %v66, 1
    %v68 = vadd.f32 %v66, %v67
    %v69 = vmul.f32 %v40, %v57
    %v70 = vmul.f32 %v41, %v57
    %v71 = vmul.f32 %v42, %v57
    %v72 = vsel %vm46, %v69, 0.0
    %73 = vadd.xlane.f32.xlu0 %v72
    %v74 = vpop.xlane.xlu0 %73
    %v75 = vsel %vm46, %v70, 0.0
    %76 = vadd.xlane.f32.xlu0 %v75
    %v77 = vpop.xlane.xlu0 %76
    %v78 = vsel %vm46, %v71, 0.0
    %79 = vadd.xlane.f32.xlu0 %v78
    %v80 = vpop.xlane.xlu0 %79
    %v81 = vmul.f32 %v40, %v68
    %v82 = vmul.f32 %v41, %v68
    %v83 = vmul.f32 %v42, %v68
    %v84 = vsel %vm46, %v81, 0.0
    %85 = vadd.xlane.f32.xlu0 %v84
    %v86 = vpop.xlane.xlu0 %85
    %v87 = vsel %vm46, %v82, 0.0
    %88 = vadd.xlane.f32.xlu0 %v87
    %v89 = vpop.xlane.xlu0 %88
    %v90 = vsel %vm46, %v83, 0.0
    %91 = vadd.xlane.f32.xlu0 %v90
    %v92 = vpop.xlane.xlu0 %91
    %vm93 = vcmask 7168
    %v94 = vsel %vm93, %v74, %v86
    %v95 = vsel %vm93, %v77, %v89
    %v96 = vsel %vm93, %v80, %v92
    %v97 = vmul.f32 %v43, %v68
    %v98 = vmul.f32 %v44, %v68
    %v99 = vmul.f32 %v45, %v68
    %v100 = vsel %vm46, %v97, 0.0
    %101 = vadd.xlane.f32.xlu0 %v100
    %v102 = vpop.xlane.xlu0 %101
    %v103 = vsel %vm46, %v98, 0.0
    %104 = vadd.xlane.f32.xlu0 %v103
    %v105 = vpop.xlane.xlu0 %104
    %v106 = vsel %vm46, %v99, 0.0
    %107 = vadd.xlane.f32.xlu0 %v106
    %v108 = vpop.xlane.xlu0 %107
    %v109 = vmul.f32 %v43, %v57
    %v110 = vmul.f32 %v44, %v57
    %v111 = vmul.f32 %v45, %v57
    %v112 = vsel %vm46, %v109, 0.0
    %113 = vadd.xlane.f32.xlu0 %v112
    %v114 = vpop.xlane.xlu0 %113
    %v115 = vsel %vm46, %v110, 0.0
    %116 = vadd.xlane.f32.xlu0 %v115
    %v117 = vpop.xlane.xlu0 %116
    %v118 = vsel %vm46, %v111, 0.0
    %119 = vadd.xlane.f32.xlu0 %v118
    %v120 = vpop.xlane.xlu0 %119
    %v121 = vsel %vm93, %v102, %v114
    %v122 = vsel %vm93, %v105, %v117
    %v123 = vsel %vm93, %v108, %v120
    %v124 = vsub.f32 0.0, %v94
    %v125 = vsub.f32 0.0, %v95
    %v126 = vsub.f32 0.0, %v96
    %v127 = vmax.f32 %v124, 0.0
    %v128 = vmax.f32 %v125, 0.0
    %v129 = vmax.f32 %v126, 0.0
    %v130 = vand.u32 2147483647, %v124
    %v131 = vand.u32 2147483647, %v125
    %v132 = vand.u32 2147483647, %v126
    %v133 = vsub.f32 0.0, %v130
    %v134 = vsub.f32 0.0, %v131
    %v135 = vsub.f32 0.0, %v132
    %v136 = vmul.f32 %v133, 1.442695
    %v137 = vpow.pop %v136
    %v138 = vmul.f32 %v134, 1.442695
    %v139 = vpow.pop %v138
    %v140 = vmul.f32 %v135, 1.442695
    %v141 = vpow.pop %v140
    %v142 = vadd.f32 %v137, 1.0
    %v143 = vadd.f32 %v139, 1.0
    %v144 = vadd.f32 %v141, 1.0
    %v145 = vlog2.pop %v142
    %v146 = vmul.f32 %v145, 0.6931472
    %v147 = vlog2.pop %v143
    %v148 = vmul.f32 %v147, 0.6931472
    %v149 = vlog2.pop %v144
    %v150 = vmul.f32 %v149, 0.6931472
    %v151 = vadd.f32 %v127, %v146
    %v152 = vadd.f32 %v128, %v148
    %v153 = vadd.f32 %v129, %v150
    %v154 = vsub.f32 0.0, %v121
    %v155 = vsub.f32 0.0, %v122
    %v156 = vsub.f32 0.0, %v123
    %v157 = vmax.f32 %v154, 0.0
    %v158 = vmax.f32 %v155, 0.0
    %v159 = vmax.f32 %v156, 0.0
    %v160 = vand.u32 2147483647, %v154
    %v161 = vand.u32 2147483647, %v155
    %v162 = vand.u32 2147483647, %v156
    %v163 = vsub.f32 0.0, %v160
    %v164 = vsub.f32 0.0, %v161
    %v165 = vsub.f32 0.0, %v162
    %v166 = vmul.f32 %v163, 1.442695
    %v167 = vpow.pop %v166
    %v168 = vmul.f32 %v164, 1.442695
    %v169 = vpow.pop %v168
    %v170 = vmul.f32 %v165, 1.442695
    %v171 = vpow.pop %v170
    %v172 = vadd.f32 %v167, 1.0
    %v173 = vadd.f32 %v169, 1.0
    %v174 = vadd.f32 %v171, 1.0
    %v175 = vlog2.pop %v172
    %v176 = vmul.f32 %v175, 0.6931472
    %v177 = vlog2.pop %v173
    %v178 = vmul.f32 %v177, 0.6931472
    %v179 = vlog2.pop %v174
    %v180 = vmul.f32 %v179, 0.6931472
    %v181 = vadd.f32 %v157, %v176
    %v182 = vadd.f32 %v158, %v178
    %v183 = vadd.f32 %v159, %v180
    %187 = vrot.lane.b32.xlu0 %v151, 1
    %v188 = vpop.permute.xlu0 %187
    %189 = vrot.lane.b32.xlu0 %v152, 1
    %v190 = vpop.permute.xlu0 %189
    %191 = vrot.lane.b32.xlu0 %v153, 1
    %v192 = vpop.permute.xlu0 %191
    %v196 = vsub.f32 %v151, %v188
    %v197 = vsub.f32 %v152, %v190
    %v198 = vsub.f32 %v153, %v192
    %202 = vrot.lane.b32.xlu0 %v196, 127
    %v203 = vpop.permute.xlu0 %202
    %204 = vrot.lane.b32.xlu0 %v197, 127
    %v205 = vpop.permute.xlu0 %204
    %206 = vrot.lane.b32.xlu0 %v198, 127
    %v207 = vpop.permute.xlu0 %206
    %v211 = vsel %vm93, %v203, 0.0
    %v212 = vsel %vm93, %v205, 0.0
    %v213 = vadd.f32 %v211, %v212
    %v214 = vsel %vm93, %v207, 0.0
    %v215 = vadd.f32 %v213, %v214
    %216 = vadd.xlane.f32.xlu0 %v215
    %v217 = vpop.xlane.xlu0 %216
    %v218 = vrot.slane %v217, 4
    %v219 = vadd.f32 %v217, %v218
    %v220 = vrot.slane %v219, 2
    %v221 = vadd.f32 %v219, %v220
    %v222 = vrot.slane %v221, 1
    %v223 = vadd.f32 %v221, %v222
    %s224 = vtos %v223
    %v225 = vstv %s224
    %229 = vrot.lane.b32.xlu0 %v181, 1
    %v230 = vpop.permute.xlu0 %229
    %231 = vrot.lane.b32.xlu0 %v182, 1
    %v232 = vpop.permute.xlu0 %231
    %233 = vrot.lane.b32.xlu0 %v183, 1
    %v234 = vpop.permute.xlu0 %233
    %v238 = vsub.f32 %v181, %v230
    %v239 = vsub.f32 %v182, %v232
    %v240 = vsub.f32 %v183, %v234
    %244 = vrot.lane.b32.xlu0 %v238, 127
    %v245 = vpop.permute.xlu0 %244
    %246 = vrot.lane.b32.xlu0 %v239, 127
    %v247 = vpop.permute.xlu0 %246
    %248 = vrot.lane.b32.xlu0 %v240, 127
    %v249 = vpop.permute.xlu0 %248
    %v253 = vsel %vm93, %v245, 0.0
    %v254 = vsel %vm93, %v247, 0.0
    %v255 = vadd.f32 %v253, %v254
    %v256 = vsel %vm93, %v249, 0.0
    %v257 = vadd.f32 %v255, %v256
    %258 = vadd.xlane.f32.xlu0 %v257
    %v259 = vpop.xlane.xlu0 %258
    %v260 = vrot.slane %v259, 4
    %v261 = vadd.f32 %v259, %v260
    %v262 = vrot.slane %v261, 2
    %v263 = vadd.f32 %v261, %v262
    %v264 = vrot.slane %v263, 1
    %v265 = vadd.f32 %v263, %v264
    %s266 = vtos %v265
    %v267 = vstv %s266
    %v268 = vsub.f32 %v225, %v267
    %vm269 = vcmask 0
    %270 = vst.msk [vmem:[#allocation7] sm:$0x1] %vm269, %v268
    // Predicated region
    $region18: #{tpu_custom_call.1} parent=1 // pred_check
      _
    $region19: #{tpu_custom_call.1} parent=1 // pred_check_branch
      %272 = sbr.rel (0) target = $region21
    $region20: #{tpu_custom_call.1} parent=1 // pred_region
      %s274 = ssub.s32 16, 16
      %275 = vsyncadd [#allocation4], %s274
      %s277 = sshll.u32 [#allocation7], 4
      %s278 = int_to_ptr.vmem [resolvable:$true] %s277
      %280 = dma.vmem_to_hbm [thread:$0]  %s278, 16, %s2, [#allocation4]
    $region21: #{tpu_custom_call.1} parent=1 // pred_fallthru
      _
    // Predicated region
    $region22: #{tpu_custom_call.1} parent=1 // pred_check
      _
    $region23: #{tpu_custom_call.1} parent=1 // pred_check_branch
      %282 = sbr.rel (0) target = $region25
    $region24: #{tpu_custom_call.1} parent=1 // pred_region
      %283 = dma.done [#allocation4], 16
    $region25: #{tpu_custom_call.1} parent=1 // pred_fallthru
      _
    %284 = vsyncpa [#allocation3], 1
    %285 = vsyncpa [#allocation6], 1
    %286 = vsyncpa [#allocation4], 1

</llo_original>
